<compile_context>
chip_gen: v7x
topology: tpu7x:2x2x1
jax: 0.10.0
libtpu: 0.0.40
codegen_flags: <defaults>
</compile_context>

<pallas_src>
import functools

import jax
import jax.numpy as jnp
from jax.experimental import pallas as pl
from jax.experimental.pallas import tpu as pltpu


def _round_up(x, m):
    return ((x + m - 1) // m) * m


def _param_decoder_kernel(t_ref, wf_ref, bf_ref, o_ref):
    """One batch tile: single fused MXU matmul + bias, full-width lane-dense store.

    t_ref : (TB, mu_dim)        VMEM (streamed per grid step)
    wf_ref: (mu_dim, out_dim_p) VMEM (resident; fused decoder-weight @ V)
    bf_ref: (1, out_dim_p)      VMEM (resident; fused bias)
    o_ref : (TB, out_dim_p)     VMEM
    """
    acc = jnp.dot(t_ref[...], wf_ref[...],
                  preferred_element_type=jnp.float32) + bf_ref[...]
    o_ref[...] = acc.astype(o_ref.dtype)


def fuse_params(w, b, V, *, need_in_dim, need_out_dim, k, lane=128):
    """One-time algebraic fusion of V into the decoder weight/bias.

    Static parameters: call once and cache the result; do NOT recompute per call.

    w: (need_in_dim*k, mu_dim)   -- PyTorch nn.Linear weight layout
    b: (need_in_dim*k,)
    V: (k, need_out_dim)
    Returns (w_fused, b_fused, out_dim) with the fused last dim padded up to a
    multiple of `lane` so the kernel's output stores stay unmasked.
    """
    mu_dim = w.shape[1]
    out_dim = need_in_dim * need_out_dim

    # Fusion win condition: 2*mu*in*out (fused) < 2*in*k*(mu+out) (unfused).
    if k * (mu_dim + need_out_dim) <= mu_dim * need_out_dim:
        # TODO(synk): for small-k configs where fusion inflates FLOPs/weight
        # footprint, stage the original two-matmul form through VMEM scratch
        # instead; fused path remains numerically correct, just suboptimal.
        pass

    w3 = w.reshape(need_in_dim, k, mu_dim)                           # (in, k, mu)
    w_fused = jnp.einsum('ikm,kj->mij', w3, V).reshape(mu_dim, out_dim)
    b_fused = (b.reshape(need_in_dim, k) @ V).reshape(1, out_dim)

    out_dim_p = _round_up(out_dim, lane)
    if out_dim_p != out_dim:
        w_fused = jnp.pad(w_fused, ((0, 0), (0, out_dim_p - out_dim)))
        b_fused = jnp.pad(b_fused, ((0, 0), (0, out_dim_p - out_dim)))
    return w_fused, b_fused, out_dim


def param_decoder_fused(t_feat, w_fused, b_fused, out_dim, *, block_b=2048):
    """Run the fused ParamDecoder forward.

    t_feat : (B, mu_dim) float32
    w_fused: (mu_dim, out_dim_p)
    b_fused: (1, out_dim_p)
    returns (B, out_dim)
    """
    B, mu_dim = t_feat.shape
    out_dim_p = w_fused.shape[1]

    # Sublane-aligned batch tile; cap at ceil(B/2) so there are >=2 grid steps
    # whenever B > 8 (both v7x TensorCores get work via the "parallel" axis).
    tb = min(block_b, max(8, _round_up(pl.cdiv(B, 2), 8)))
    grid = (pl.cdiv(B, tb),)

    out = pl.pallas_call(
        _param_decoder_kernel,
        out_shape=jax.ShapeDtypeStruct((B, out_dim_p), t_feat.dtype),
        grid=grid,
        in_specs=[
            pl.BlockSpec((tb, mu_dim), lambda i: (i, 0)),          # streamed
            pl.BlockSpec((mu_dim, out_dim_p), lambda i: (0, 0)),   # resident
            pl.BlockSpec((1, out_dim_p), lambda i: (0, 0)),        # resident
        ],
        out_specs=pl.BlockSpec((tb, out_dim_p), lambda i: (i, 0)),
        compiler_params=pltpu.CompilerParams(
            dimension_semantics=("parallel",)),
    )(t_feat, w_fused, b_fused)

    if out_dim_p != out_dim:
        out = out[:, :out_dim]
    return out


def param_decoder(t_feat, w, b, V, *, need_in_dim, need_out_dim, k,
                  block_b=2048):
    """Convenience wrapper matching the original module's forward signature.
    (Production code should call `fuse_params` once and reuse the result.)"""
    w_fused, b_fused, out_dim = fuse_params(
        w, b, V, need_in_dim=need_in_dim, need_out_dim=need_out_dim, k=k)
    return param_decoder_fused(t_feat, w_fused, b_fused, out_dim,
                               block_b=block_b)


if __name__ == "__main__":
    # Small shapes consistent with the module's forward.
    B = 2
    mu_dim = 32
    need_in_dim = 8
    need_out_dim = 16
    k = 30

    key = jax.random.PRNGKey(0)
    k_t, k_w, k_b, k_v = jax.random.split(key, 4)

    t_feat = jax.random.normal(k_t, (B, mu_dim), dtype=jnp.float32)
    # nn.Linear(mu_dim, need_in_dim*k): weight (need_in_dim*k, mu_dim), bias (need_in_dim*k,)
    w = jax.random.normal(k_w, (need_in_dim * k, mu_dim), dtype=jnp.float32) * 0.05
    b = jax.random.normal(k_b, (need_in_dim * k,), dtype=jnp.float32) * 0.05
    # self.V is zero-initialized in __init__; use random values here so the
    # numerical check is non-trivial (forward semantics are identical).
    V = jax.random.normal(k_v, (k, need_out_dim), dtype=jnp.float32) * 0.05

    # One-time static-parameter fusion (cached in real use), then the kernel.
    w_fused, b_fused, out_dim = fuse_params(
        w, b, V, need_in_dim=need_in_dim, need_out_dim=need_out_dim, k=k)
    run = functools.partial(param_decoder_fused, out_dim=out_dim)
    out = jax.block_until_ready(run(t_feat, w_fused, b_fused))

    # Pure-JAX reference of the PyTorch forward.
    U = t_feat @ w.T + b
    U3 = U.reshape(B, need_in_dim, k)
    ref = jnp.einsum('bik,kj->bij', U3, V).reshape(B, -1)

    assert out.shape == (B, need_in_dim * need_out_dim)
    # NOTE: fusion reorders the reduction (t @ (W^T V) vs (t @ W^T) @ V), so a
    # small fp drift vs the reference is expected; 1e-4 tolerance covers it.
    assert jnp.allclose(out, ref, atol=1e-4, rtol=1e-4), "mismatch vs reference"
    print("KERNEL_OK")
</pallas_src>

<mosaic_0001>
module attributes {stable_mosaic.version = 11 : i64} {
  func.func @_param_decoder_kernel(%arg0: i32, %arg1: memref<8x32xf32, #tpu.memory_space<vmem>>, %arg2: memref<32x128xf32, #tpu.memory_space<vmem>>, %arg3: memref<1x128xf32, #tpu.memory_space<vmem>>, %arg4: memref<8x128xf32, #tpu.memory_space<vmem>>) attributes {dimension_semantics = [#tpu.dimension_semantics<parallel>], iteration_bounds = array<i64: 1>, scalar_prefetch = 0 : i64, scratch_operands = 0 : i64, tpu.core_type = #tpu.core_type<tc>, window_params = [{transform_indices = @transform_0, window_bounds = array<i64: 8, 32>}, {pipeline_mode = #tpu.pipeline_mode<synchronous>, transform_indices = @transform_1, window_bounds = array<i64: 32, 128>}, {pipeline_mode = #tpu.pipeline_mode<synchronous>, transform_indices = @transform_2, window_bounds = array<i64: 1, 128>}, {transform_indices = @transform_3, window_bounds = array<i64: 8, 128>}]} {
    %c0 = arith.constant 0 : index
    %c0_0 = arith.constant 0 : index
    %0 = vector.load %arg1[%c0, %c0_0] : memref<8x32xf32, #tpu.memory_space<vmem>>, vector<8x32xf32>
    %c0_1 = arith.constant 0 : index
    %c0_2 = arith.constant 0 : index
    %1 = vector.load %arg2[%c0_1, %c0_2] : memref<32x128xf32, #tpu.memory_space<vmem>>, vector<32x128xf32>
    %cst = arith.constant dense<0.000000e+00> : vector<8x128xf32>
    %2 = tpu.matmul %0, %1, %cst {dimension_numbers = #tpu.dot_dimension_numbers<[1], [0], [0], [1], [0, 0, 1, 1], [], []>} : vector<8x32xf32>, vector<32x128xf32>, vector<8x128xf32> -> vector<8x128xf32>
    %c0_3 = arith.constant 0 : index
    %c0_4 = arith.constant 0 : index
    %3 = vector.load %arg3[%c0_3, %c0_4] : memref<1x128xf32, #tpu.memory_space<vmem>>, vector<1x128xf32>
    %4 = vector.broadcast %3 : vector<1x128xf32> to vector<8x128xf32>
    %5 = arith.addf %2, %4 : vector<8x128xf32>
    %c0_5 = arith.constant 0 : index
    %c0_6 = arith.constant 0 : index
    %6 = vector.load %arg4[%c0_5, %c0_6] : memref<8x128xf32, #tpu.memory_space<vmem>>, vector<8x128xf32>
    tpu.vector_store %arg4[%c0_5, %c0_6], %5 {strides = array<i32>} : memref<8x128xf32, #tpu.memory_space<vmem>>, vector<8x128xf32>,
    return
  }
  func.func @transform_0(%arg0: i32) -> (i32, i32) {
    %c0_i32 = arith.constant 0 : i32
    %c0_i32_0 = arith.constant 0 : i32
    return %arg0, %c0_i32 : i32, i32
  }
  func.func @transform_1(%arg0: i32) -> (i32, i32) {
    %c0_i32 = arith.constant 0 : i32
    %c0_i32_0 = arith.constant 0 : i32
    %c0_i32_1 = arith.constant 0 : i32
    return %c0_i32, %c0_i32_0 : i32, i32
  }
  func.func @transform_2(%arg0: i32) -> (i32, i32) {
    %c0_i32 = arith.constant 0 : i32
    %c0_i32_0 = arith.constant 0 : i32
    %c0_i32_1 = arith.constant 0 : i32
    return %c0_i32, %c0_i32_0 : i32, i32
  }
  func.func @transform_3(%arg0: i32) -> (i32, i32) {
    %c0_i32 = arith.constant 0 : i32
    %c0_i32_0 = arith.constant 0 : i32
    return %arg0, %c0_i32 : i32, i32
  }
}

</mosaic_0001>

<llo_original>
// kernel: tpu_custom_call.1
$region0: #{tpu_custom_call.1}
  #allocation0 [shape = 'u32[]', space=smem, size = 0x4, offset = 0x4, fixed_abs, tag = 'smem constant byte address 0x4 - core index']
  #allocation1 [shape = 'u32[144,128]{1,0:T(1,128)}', space=vmem, size = 0x12000, scoped, tag = 'internal scratch']
  %s0 = inlined_call_operand.hbm [shape: f32[2,32], index: 0, kind: input, shape index: {}]
  %s1 = inlined_call_operand.hbm [shape: f32[32,128], index: 1, kind: input, shape index: {}]
  %s2 = inlined_call_operand.vmem [shape: f32[1,128], index: 2, kind: input, shape index: {}]
  %s3 = inlined_call_operand.hbm [shape: f32[2,128], index: 3, kind: output, shape index: {}]
  %s4 = sld [smem:[#allocation0]]
  $region30: #{tpu_custom_call.1} parent=0
    _
  %s6 = ssub.s32 1, %s4
  %s7 = scalar_select 0, %s6, %s4
  $region1: #{tpu_custom_call.1} parent=0
    #allocation2 [shape = 'u8[4096]{0}', space=vmem, size = 0x1000, scoped, tag = 'input window, operand 0, single buffered']
    #allocation3 [shape = 's32[1]{0}', space=sflag, size = 0x4, scoped, tag = 'scoped memory for tpu_custom_call.1']
    #allocation4 [shape = 's32[1]{0}', space=sflag, size = 0x4, scoped, tag = 'scoped memory for tpu_custom_call.1']
    #allocation5 [shape = 'u8[16384]{0}', space=vmem, size = 0x4000, scoped, tag = 'input window, operand 1, single buffered']
    #allocation6 [shape = 's32[1]{0}', space=sflag, size = 0x4, scoped, tag = 'scoped memory for tpu_custom_call.1']
    #allocation7 [shape = 'u8[4096]{0}', space=vmem, size = 0x1000, scoped, tag = 'output window, operand 0, single buffered']
    %8 = vsyncpa [#allocation3], 0
    %9 = vsyncpa [#allocation6], 0
    %10 = vsyncpa [#allocation4], 0
    // Predicated region
    $region2: #{tpu_custom_call.1} parent=1 // pred_check
      _
    $region3: #{tpu_custom_call.1} parent=1 // pred_check_branch
      %12 = sbr.rel (0) target = $region5
    $region4: #{tpu_custom_call.1} parent=1 // pred_region
      %s14 = ssub.s32 128, 32
      %15 = vsyncadd [#allocation3], %s14
      %s16 = sshll.u32 [#allocation2], 4
      %s17 = int_to_ptr.vmem [resolvable:$true] %s16
      %22 = dma.hbm_to_vmem [thread:$0]  %s0, 32, %s17, [#allocation3], 32, 32, 2
    $region5: #{tpu_custom_call.1} parent=1 // pred_fallthru
      _
    // Predicated region
    $region6: #{tpu_custom_call.1} parent=1 // pred_check
      _
    $region7: #{tpu_custom_call.1} parent=1 // pred_check_branch
      %24 = sbr.rel (0) target = $region9
    $region8: #{tpu_custom_call.1} parent=1 // pred_region
      %s26 = ssub.s32 512, 512
      %27 = vsyncadd [#allocation6], %s26
      %s28 = sshll.u32 [#allocation5], 4
      %s29 = int_to_ptr.vmem [resolvable:$true] %s28
      %34 = dma.hbm_to_vmem [thread:$0]  %s1, 512, %s29, [#allocation6], 128, 128, 8
    $region9: #{tpu_custom_call.1} parent=1 // pred_fallthru
      _
    // Predicated region
    $region10: #{tpu_custom_call.1} parent=1 // pred_check
      _
    $region11: #{tpu_custom_call.1} parent=1 // pred_check_branch
      %36 = sbr.rel (0) target = $region13
    $region12: #{tpu_custom_call.1} parent=1 // pred_region
      _
    $region13: #{tpu_custom_call.1} parent=1 // pred_fallthru
      _
    // Predicated region
    $region14: #{tpu_custom_call.1} parent=1 // pred_check
      _
    $region15: #{tpu_custom_call.1} parent=1 // pred_check_branch
      %38 = sbr.rel (0) target = $region17
    $region16: #{tpu_custom_call.1} parent=1 // pred_region
      %39 = dma.done [#allocation3], 128
    $region17: #{tpu_custom_call.1} parent=1 // pred_fallthru
      _
    // Predicated region
    $region18: #{tpu_custom_call.1} parent=1 // pred_check
      _
    $region19: #{tpu_custom_call.1} parent=1 // pred_check_branch
      %41 = sbr.rel (0) target = $region21
    $region20: #{tpu_custom_call.1} parent=1 // pred_region
      %42 = dma.done [#allocation6], 512
    $region21: #{tpu_custom_call.1} parent=1 // pred_fallthru
      _
    %v43 = vld [vmem:[#allocation2] sm:$0xff]
    %v44 = vld [vmem:[#allocation5] sm:$0xff]
    %v45 = vld [vmem:[#allocation5 + $0x8] sm:$0xff]
    %v46 = vld [vmem:[#allocation5 + $0x10] sm:$0xff]
    %v47 = vld [vmem:[#allocation5 + $0x18] sm:$0xff]
    %v48 = vld [vmem:[%s2] sm:$0x1]
    %v50 = vlaneseq
    %v51 = vshrl.u32 %v50, 7
    %v52 = vsub.s32 0, %v51
    %v53 = vrot.slane %v48, %v52
    %vm55 = vcmask 261120
    %v57 = vsel %vm55, %v43, 0
    %59 = vmatprep.subr.mxu0 0.0
    %60 = vmatpush1.msra.mxu0 %v44
    %61 = vmatprep.subr.mxu0 0.0
    %62 = vmatpush1.msra.mxu0 %v45
    %63 = vmatprep.subr.mxu0 0.0
    %64 = vmatpush1.msra.mxu0 %v46
    %65 = vmatprep.subr.mxu0 0.0
    %66 = vmatpush1.msra.mxu0 %v47
    %67 = vmatprep.subr.mxu0 0.0
    %68 = vmatpush1.msra.mxu0 0.0
    %69 = vmatprep.subr.mxu0 0.0
    %70 = vmatpush1.msra.mxu0 0.0
    %71 = vmatprep.subr.mxu0 0.0
    %72 = vmatpush1.msra.mxu0 0.0
    %73 = vmatprep.subr.mxu0 0.0
    %74 = vmatpush1.msra.mxu0 0.0
    %75 = vmatprep.subr.mxu0 0.0
    %76 = vmatpush1.msra.mxu0 0.0
    %77 = vmatprep.subr.mxu0 0.0
    %78 = vmatpush1.msra.mxu0 0.0
    %79 = vmatprep.subr.mxu0 0.0
    %80 = vmatpush1.msra.mxu0 0.0
    %81 = vmatprep.subr.mxu0 0.0
    %82 = vmatpush1.msra.mxu0 0.0
    %83 = vmatprep.subr.mxu0 0.0
    %84 = vmatpush1.msra.mxu0 0.0
    %85 = vmatprep.subr.mxu0 0.0
    %86 = vmatpush1.msra.mxu0 0.0
    %87 = vmatprep.subr.mxu0 0.0
    %88 = vmatpush1.msra.mxu0 0.0
    %89 = vmatprep.subr.mxu0 0.0
    %90 = vmatpush1.msra.mxu0 0.0
    %91 = vmatprep.subr.mxu0 0.0
    %92 = vmatpush1.msra.mxu0 0.0
    %93 = vmatprep.subr.mxu0 0.0
    %94 = vmatpush1.msra.mxu0 0.0
    %95 = vmatprep.subr.mxu0 0.0
    %96 = vmatpush1.msra.mxu0 0.0
    %97 = vmatprep.subr.mxu0 0.0
    %98 = vmatpush1.msra.mxu0 0.0
    %99 = vmatprep.subr.mxu0 0.0
    %100 = vmatpush1.msra.mxu0 0.0
    %101 = vmatprep.subr.mxu0 0.0
    %102 = vmatpush1.msra.mxu0 0.0
    %103 = vmatprep.subr.mxu0 0.0
    %104 = vmatpush1.msra.mxu0 0.0
    %105 = vmatprep.subr.mxu0 0.0
    %106 = vmatpush1.msra.mxu0 0.0
    %107 = vmatprep.subr.mxu0 0.0
    %108 = vmatpush1.msra.mxu0 0.0
    %109 = vmatprep.subr.mxu0 0.0
    %110 = vmatpush1.msra.mxu0 0.0
    %111 = vmatprep.subr.mxu0 0.0
    %112 = vmatpush1.msra.mxu0 0.0
    %113 = vmatprep.subr.mxu0 0.0
    %114 = vmatpush1.msra.mxu0 0.0
    %115 = vmatprep.subr.mxu0 0.0
    %116 = vmatpush1.msra.mxu0 0.0
    %117 = vmatprep.subr.mxu0 0.0
    %118 = vmatpush1.msra.mxu0 0.0
    %119 = vmatprep.subr.mxu0 0.0
    %120 = vmatpush1.msra.mxu0 0.0
    %121 = vmatprep.subr.mxu0 0.0
    %122 = vmatpush1.msra.mxu0 0.0
    %123 = vmatprep.mubr.f32.mxu0 0.0
    %124 = vmatmul.mubr.f32.gmra.mrb[0].mxu0 %v57
    %v125 = vpop.f32.mrb[0].mxu0
    %v126 = vadd.f32 %v53, %v125
    %v127 = vpop.f32.mrb[0].mxu0
    %128 = vdwg.mxu0
    %129 = vst [vmem:[#allocation7] sm:$0xff] %v126
    // Predicated region
    $region22: #{tpu_custom_call.1} parent=1 // pred_check
      _
    $region23: #{tpu_custom_call.1} parent=1 // pred_check_branch
      %131 = sbr.rel (0) target = $region25
    $region24: #{tpu_custom_call.1} parent=1 // pred_region
      %s133 = ssub.s32 128, 32
      %134 = vsyncadd [#allocation4], %s133
      %s135 = sshll.u32 [#allocation7], 4
      %s136 = int_to_ptr.vmem [resolvable:$true] %s135
      %141 = dma.vmem_to_hbm [thread:$0]  %s136, 32, %s3, [#allocation4], 32, 32, 2
    $region25: #{tpu_custom_call.1} parent=1 // pred_fallthru
      _
    // Predicated region
    $region26: #{tpu_custom_call.1} parent=1 // pred_check
      _
    $region27: #{tpu_custom_call.1} parent=1 // pred_check_branch
      %143 = sbr.rel (0) target = $region29
    $region28: #{tpu_custom_call.1} parent=1 // pred_region
      %144 = dma.done [#allocation4], 128
    $region29: #{tpu_custom_call.1} parent=1 // pred_fallthru
      _
    %145 = vsyncpa [#allocation3], 1
    %146 = vsyncpa [#allocation6], 1
    %147 = vsyncpa [#allocation4], 1

</llo_original>
